<compile_context>
chip_gen: v5e
topology: v5e:2x2
jax: 0.10.0
libtpu: 0.0.40
codegen_flags: <defaults>
</compile_context>

<pallas_src>
import math
import functools

import jax
import jax.numpy as jnp
from jax.experimental import pallas as pl
from jax.experimental.pallas import tpu as pltpu

HIDDEN_LAYER_SIZE = 256
LOG_STD_MAX = 2.0
LOG_STD_MIN = -5.0


def actor_kernel(x_ref, w1_ref, b1_ref, w2_ref, b2_ref, wh_ref, bh_ref,
                 eps_ref, act_ref, logp_ref, *, d_out):
    # x / weights may be bf16; matmuls accumulate in f32 on the MXU.
    x = x_ref[...]

    # Linear -> ReLU -> Linear -> ReLU  (last Linear of BaseNN removed)
    h1 = jnp.dot(x, w1_ref[...], preferred_element_type=jnp.float32) + b1_ref[...]
    h1 = jnp.maximum(h1, 0.0).astype(w2_ref.dtype)
    h2 = jnp.dot(h1, w2_ref[...], preferred_element_type=jnp.float32) + b2_ref[...]
    h2 = jnp.maximum(h2, 0.0).astype(wh_ref.dtype)

    # Merged mean|log_std head: one (H, 2*d_out) matmul, slice afterwards.
    heads = jnp.dot(h2, wh_ref[...], preferred_element_type=jnp.float32) + bh_ref[...]
    mean = heads[:, :d_out]
    log_std = heads[:, d_out:2 * d_out]
    log_std = jnp.clip(log_std, LOG_STD_MIN, LOG_STD_MAX)
    std = jnp.exp(log_std)

    # dist.rsample():  action = mean + std * eps
    eps = eps_ref[...]
    action = mean + std * eps

    # squash
    act_ref[...] = jnp.tanh(action)

    # Normal(mean, std).log_prob(action).sum(-1); (action - mean)/std == eps.
    log_prob = (-0.5 * jnp.square(eps)
                - log_std
                - 0.5 * math.log(2.0 * math.pi))
    lp = jnp.sum(log_prob, axis=-1, keepdims=True)

    # tanh correction: 2*(log(2) - a - softplus(-2a)), summed over action dim
    z = -2.0 * action
    softplus_z = jnp.maximum(z, 0.0) + jnp.log1p(jnp.exp(-jnp.abs(z)))
    corr = 2.0 * (math.log(2.0) - action - softplus_z)
    lp = lp - jnp.sum(corr, axis=-1, keepdims=True)

    logp_ref[...] = lp


def actor_forward(x, params, eps, *, tm=None, matmul_dtype=jnp.bfloat16):
    """Runs the fused Actor forward Pallas kernel.

    x: (N, input_size) float32, eps: (N, output_size) float32.
    Returns (tanh_action (N, output_size), log_probs (N, 1)).
    tm: batch tile size; default min(N, 256).  Use <=128 on v5e.
    """
    w1, b1, w2, b2, wm, bm, wc, bc = params
    N, d_in = x.shape
    H = w1.shape[1]
    d_out = wm.shape[1]

    if tm is None:
        tm = min(N, 256)
    assert N % tm == 0, "batch size must be divisible by the batch tile"

    # Merge the two heads into a single matmul.
    wh = jnp.concatenate([wm, wc], axis=1)          # (H, 2*d_out)
    bh = jnp.concatenate([bm, bc], axis=1)          # (1, 2*d_out)

    # bf16 matmul inputs (f32 accumulation inside the kernel); biases stay f32.
    x_c = x.astype(matmul_dtype)
    w1_c = w1.astype(matmul_dtype)
    w2_c = w2.astype(matmul_dtype)
    wh_c = wh.astype(matmul_dtype)

    full = lambda shape: pl.BlockSpec(shape, lambda i: (0,) * len(shape))
    grid = (N // tm,)

    out_shapes = (
        jax.ShapeDtypeStruct((N, d_out), jnp.float32),
        jax.ShapeDtypeStruct((N, 1), jnp.float32),
    )

    return pl.pallas_call(
        functools.partial(actor_kernel, d_out=d_out),
        out_shape=out_shapes,
        grid_spec=pltpu.PrefetchScalarGridSpec(
            num_scalar_prefetch=0,
            grid=grid,
            in_specs=[
                pl.BlockSpec((tm, d_in), lambda i: (i, 0)),   # x  (tiled over batch)
                full((d_in, H)),                              # w1
                full((1, H)),                                 # b1
                full((H, H)),                                 # w2
                full((1, H)),                                 # b2
                full((H, 2 * d_out)),                         # wh (mean|log_std)
                full((1, 2 * d_out)),                         # bh
                pl.BlockSpec((tm, d_out), lambda i: (i, 0)),  # eps
            ],
            out_specs=[
                pl.BlockSpec((tm, d_out), lambda i: (i, 0)),
                pl.BlockSpec((tm, 1), lambda i: (i, 0)),
            ],
        ),
        compiler_params=pltpu.CompilerParams(
            dimension_semantics=("parallel",)),
    )(x_c, w1_c, b1, w2_c, b2, wh_c, bh, eps)


def init_linear(key, fan_in, fan_out):
    """Deterministic PyTorch-style uniform init; weight stored as (in, out)."""
    kw, kb = jax.random.split(key)
    bound = 1.0 / math.sqrt(fan_in)
    w = jax.random.uniform(kw, (fan_in, fan_out), jnp.float32, -bound, bound)
    b = jax.random.uniform(kb, (1, fan_out), jnp.float32, -bound, bound)
    return w, b


def reference_forward(x, params, eps, matmul_dtype=jnp.bfloat16):
    """Pure-JAX reference matching the PyTorch Actor.forward semantics.

    Uses the same matmul input precision (bf16 in / f32 accumulate) as the
    kernel so the comparison is tight.
    """
    w1, b1, w2, b2, wm, bm, wc, bc = params
    dot = lambda a, b: jnp.dot(a.astype(matmul_dtype), b.astype(matmul_dtype),
                               preferred_element_type=jnp.float32)
    h1 = jax.nn.relu(dot(x, w1) + b1)
    h2 = jax.nn.relu(dot(h1, w2) + b2)
    mean = dot(h2, wm) + bm
    log_std = jnp.clip(dot(h2, wc) + bc, LOG_STD_MIN, LOG_STD_MAX)
    std = jnp.exp(log_std)
    action = mean + std * eps
    tan_action = jnp.tanh(action)
    log_prob = (-0.5 * jnp.square((action - mean) / std)
                - log_std - 0.5 * math.log(2 * math.pi))
    lp = jnp.sum(log_prob, axis=-1)
    lp -= jnp.sum(2.0 * (math.log(2.0) - action - jax.nn.softplus(-2.0 * action)),
                  axis=-1)
    return tan_action, lp[:, None]


if __name__ == "__main__":
    # Small SAC-style shapes: batch=16, state dim=16, action dim=8, hidden=256.
    N, INPUT_SIZE, OUTPUT_SIZE, H = 16, 16, 8, HIDDEN_LAYER_SIZE

    key = jax.random.PRNGKey(0)
    kx, keps, k1, k2, k3, k4 = jax.random.split(key, 6)

    x = jax.random.normal(kx, (N, INPUT_SIZE), jnp.float32)
    eps = jax.random.normal(keps, (N, OUTPUT_SIZE), jnp.float32)  # rsample noise

    w1, b1 = init_linear(k1, INPUT_SIZE, H)
    w2, b2 = init_linear(k2, H, H)
    wm, bm = init_linear(k3, H, OUTPUT_SIZE)
    wc, bc = init_linear(k4, H, OUTPUT_SIZE)
    params = (w1, b1, w2, b2, wm, bm, wc, bc)

    # tm defaults to min(N, 256) => one grid block for this demo size.
    act, logp = jax.jit(actor_forward)(x, params, eps)
    jax.block_until_ready((act, logp))

    act_ref, logp_ref = reference_forward(x, params, eps)
    assert act.shape == (N, OUTPUT_SIZE) and logp.shape == (N, 1)
    assert jnp.allclose(act, act_ref, atol=2e-3, rtol=2e-3)
    assert jnp.allclose(logp, logp_ref, atol=5e-3, rtol=5e-3)

    print("KERNEL_OK")
</pallas_src>

<mosaic_0001>
module attributes {stable_mosaic.version = 11 : i64} {
  func.func @actor_kernel(%arg0: i32, %arg1: memref<16x16xbf16, #tpu.memory_space<vmem>>, %arg2: memref<16x256xbf16, #tpu.memory_space<vmem>>, %arg3: memref<1x256xf32, #tpu.memory_space<vmem>>, %arg4: memref<256x256xbf16, #tpu.memory_space<vmem>>, %arg5: memref<1x256xf32, #tpu.memory_space<vmem>>, %arg6: memref<256x16xbf16, #tpu.memory_space<vmem>>, %arg7: memref<1x16xf32, #tpu.memory_space<vmem>>, %arg8: memref<16x8xf32, #tpu.memory_space<vmem>>, %arg9: memref<16x8xf32, #tpu.memory_space<vmem>>, %arg10: memref<16x1xf32, #tpu.memory_space<vmem>>) attributes {dimension_semantics = [#tpu.dimension_semantics<parallel>], iteration_bounds = array<i64: 1>, scalar_prefetch = 0 : i64, scratch_operands = 0 : i64, tpu.core_type = #tpu.core_type<tc>, window_params = [{transform_indices = @transform_0, window_bounds = array<i64: 16, 16>}, {pipeline_mode = #tpu.pipeline_mode<synchronous>, transform_indices = @transform_1, window_bounds = array<i64: 16, 256>}, {pipeline_mode = #tpu.pipeline_mode<synchronous>, transform_indices = @transform_2, window_bounds = array<i64: 1, 256>}, {pipeline_mode = #tpu.pipeline_mode<synchronous>, transform_indices = @transform_3, window_bounds = array<i64: 256, 256>}, {pipeline_mode = #tpu.pipeline_mode<synchronous>, transform_indices = @transform_4, window_bounds = array<i64: 1, 256>}, {pipeline_mode = #tpu.pipeline_mode<synchronous>, transform_indices = @transform_5, window_bounds = array<i64: 256, 16>}, {pipeline_mode = #tpu.pipeline_mode<synchronous>, transform_indices = @transform_6, window_bounds = array<i64: 1, 16>}, {transform_indices = @transform_7, window_bounds = array<i64: 16, 8>}, {transform_indices = @transform_8, window_bounds = array<i64: 16, 8>}, {transform_indices = @transform_9, window_bounds = array<i64: 16, 1>}]} {
    %c0 = arith.constant 0 : index
    %c0_0 = arith.constant 0 : index
    %0 = vector.load %arg1[%c0, %c0_0] : memref<16x16xbf16, #tpu.memory_space<vmem>>, vector<16x16xbf16>
    %c0_1 = arith.constant 0 : index
    %c0_2 = arith.constant 0 : index
    %1 = vector.load %arg2[%c0_1, %c0_2] : memref<16x256xbf16, #tpu.memory_space<vmem>>, vector<16x256xbf16>
    %cst = arith.constant dense<0.000000e+00> : vector<16x256xf32>
    %2 = tpu.matmul %0, %1, %cst {dimension_numbers = #tpu.dot_dimension_numbers<[1], [0], [0], [1], [0, 0, 1, 1], [], []>} : vector<16x16xbf16>, vector<16x256xbf16>, vector<16x256xf32> -> vector<16x256xf32>
    %c0_3 = arith.constant 0 : index
    %c0_4 = arith.constant 0 : index
    %3 = vector.load %arg3[%c0_3, %c0_4] : memref<1x256xf32, #tpu.memory_space<vmem>>, vector<1x256xf32>
    %4 = vector.broadcast %3 : vector<1x256xf32> to vector<16x256xf32>
    %5 = arith.addf %2, %4 : vector<16x256xf32>
    %cst_5 = arith.constant 0.000000e+00 : f32
    %6 = vector.broadcast %cst_5 : f32 to vector<16x256xf32>
    %7 = arith.maximumf %5, %6 : vector<16x256xf32>
    %8 = arith.truncf %7 : vector<16x256xf32> to vector<16x256xbf16>
    %c0_6 = arith.constant 0 : index
    %c0_7 = arith.constant 0 : index
    %9 = vector.load %arg4[%c0_6, %c0_7] : memref<256x256xbf16, #tpu.memory_space<vmem>>, vector<256x256xbf16>
    %cst_8 = arith.constant dense<0.000000e+00> : vector<16x256xf32>
    %10 = tpu.matmul %8, %9, %cst_8 {dimension_numbers = #tpu.dot_dimension_numbers<[1], [0], [0], [1], [0, 0, 1, 1], [], []>} : vector<16x256xbf16>, vector<256x256xbf16>, vector<16x256xf32> -> vector<16x256xf32>
    %c0_9 = arith.constant 0 : index
    %c0_10 = arith.constant 0 : index
    %11 = vector.load %arg5[%c0_9, %c0_10] : memref<1x256xf32, #tpu.memory_space<vmem>>, vector<1x256xf32>
    %12 = vector.broadcast %11 : vector<1x256xf32> to vector<16x256xf32>
    %13 = arith.addf %10, %12 : vector<16x256xf32>
    %cst_11 = arith.constant 0.000000e+00 : f32
    %14 = vector.broadcast %cst_11 : f32 to vector<16x256xf32>
    %15 = arith.maximumf %13, %14 : vector<16x256xf32>
    %16 = arith.truncf %15 : vector<16x256xf32> to vector<16x256xbf16>
    %c0_12 = arith.constant 0 : index
    %c0_13 = arith.constant 0 : index
    %17 = vector.load %arg6[%c0_12, %c0_13] : memref<256x16xbf16, #tpu.memory_space<vmem>>, vector<256x16xbf16>
    %cst_14 = arith.constant dense<0.000000e+00> : vector<16x16xf32>
    %18 = tpu.matmul %16, %17, %cst_14 {dimension_numbers = #tpu.dot_dimension_numbers<[1], [0], [0], [1], [0, 0, 1, 1], [], []>} : vector<16x256xbf16>, vector<256x16xbf16>, vector<16x16xf32> -> vector<16x16xf32>
    %c0_15 = arith.constant 0 : index
    %c0_16 = arith.constant 0 : index
    %19 = vector.load %arg7[%c0_15, %c0_16] : memref<1x16xf32, #tpu.memory_space<vmem>>, vector<1x16xf32>
    %20 = vector.broadcast %19 : vector<1x16xf32> to vector<16x16xf32>
    %21 = arith.addf %18, %20 : vector<16x16xf32>
    %22 = vector.extract_strided_slice %21 {offsets = [0, 0], sizes = [16, 8], strides = [1, 1]} : vector<16x16xf32> to vector<16x8xf32>
    %23 = vector.extract_strided_slice %21 {offsets = [0, 8], sizes = [16, 8], strides = [1, 1]} : vector<16x16xf32> to vector<16x8xf32>
    %cst_17 = arith.constant -5.000000e+00 : f32
    %cst_18 = arith.constant 2.000000e+00 : f32
    %24 = vector.broadcast %cst_17 : f32 to vector<16x8xf32>
    %25 = arith.maximumf %24, %23 : vector<16x8xf32>
    %26 = vector.broadcast %cst_18 : f32 to vector<16x8xf32>
    %27 = arith.minimumf %26, %25 : vector<16x8xf32>
    %28 = math.exp %27 : vector<16x8xf32>
    %c0_19 = arith.constant 0 : index
    %c0_20 = arith.constant 0 : index
    %29 = vector.load %arg8[%c0_19, %c0_20] : memref<16x8xf32, #tpu.memory_space<vmem>>, vector<16x8xf32>
    %30 = arith.mulf %28, %29 : vector<16x8xf32>
    %31 = arith.addf %22, %30 : vector<16x8xf32>
    %32 = math.tanh %31 : vector<16x8xf32>
    %c0_21 = arith.constant 0 : index
    %c0_22 = arith.constant 0 : index
    %33 = vector.load %arg9[%c0_21, %c0_22] : memref<16x8xf32, #tpu.memory_space<vmem>>, vector<16x8xf32>
    tpu.vector_store %arg9[%c0_21, %c0_22], %32 {strides = array<i32>} : memref<16x8xf32, #tpu.memory_space<vmem>>, vector<16x8xf32>,
    %34 = arith.mulf %29, %29 : vector<16x8xf32>
    %cst_23 = arith.constant -5.000000e-01 : f32
    %35 = vector.broadcast %cst_23 : f32 to vector<16x8xf32>
    %36 = arith.mulf %35, %34 : vector<16x8xf32>
    %37 = arith.subf %36, %27 : vector<16x8xf32>
    %cst_24 = arith.constant 0.918938517 : f32
    %38 = vector.broadcast %cst_24 : f32 to vector<16x8xf32>
    %39 = arith.subf %37, %38 : vector<16x8xf32>
    %cst_25 = arith.constant dense<0.000000e+00> : vector<16xf32>
    %40 = vector.multi_reduction <add>, %39, %cst_25 [1] : vector<16x8xf32> to vector<16xf32>
    %41 = vector.shape_cast %40 : vector<16xf32> to vector<16x1xf32>
    %cst_26 = arith.constant -2.000000e+00 : f32
    %42 = vector.broadcast %cst_26 : f32 to vector<16x8xf32>
    %43 = arith.mulf %42, %31 : vector<16x8xf32>
    %cst_27 = arith.constant 0.000000e+00 : f32
    %44 = vector.broadcast %cst_27 : f32 to vector<16x8xf32>
    %45 = arith.maximumf %43, %44 : vector<16x8xf32>
    %46 = math.absf %43 : vector<16x8xf32>
    %cst_28 = arith.constant 0.000000e+00 : f32
    %47 = vector.broadcast %cst_28 : f32 to vector<16x8xf32>
    %48 = arith.subf %47, %46 : vector<16x8xf32>
    %49 = math.exp %48 : vector<16x8xf32>
    %50 = math.log1p %49 : vector<16x8xf32>
    %51 = arith.addf %45, %50 : vector<16x8xf32>
    %cst_29 = arith.constant 0.693147182 : f32
    %52 = vector.broadcast %cst_29 : f32 to vector<16x8xf32>
    %53 = arith.subf %52, %31 : vector<16x8xf32>
    %54 = arith.subf %53, %51 : vector<16x8xf32>
    %cst_30 = arith.constant 2.000000e+00 : f32
    %55 = vector.broadcast %cst_30 : f32 to vector<16x8xf32>
    %56 = arith.mulf %55, %54 : vector<16x8xf32>
    %cst_31 = arith.constant dense<0.000000e+00> : vector<16xf32>
    %57 = vector.multi_reduction <add>, %56, %cst_31 [1] : vector<16x8xf32> to vector<16xf32>
    %58 = vector.shape_cast %57 : vector<16xf32> to vector<16x1xf32>
    %59 = arith.subf %41, %58 : vector<16x1xf32>
    %c0_32 = arith.constant 0 : index
    %c0_33 = arith.constant 0 : index
    %60 = vector.load %arg10[%c0_32, %c0_33] : memref<16x1xf32, #tpu.memory_space<vmem>>, vector<16x1xf32>
    tpu.vector_store %arg10[%c0_32, %c0_33], %59 {strides = array<i32>} : memref<16x1xf32, #tpu.memory_space<vmem>>, vector<16x1xf32>,
    return
  }
  func.func @transform_0(%arg0: i32) -> (i32, i32) {
    %c0_i32 = arith.constant 0 : i32
    %c0_i32_0 = arith.constant 0 : i32
    return %arg0, %c0_i32 : i32, i32
  }
  func.func @transform_1(%arg0: i32) -> (i32, i32) {
    %c0_i32 = arith.constant 0 : i32
    %c0_i32_0 = arith.constant 0 : i32
    %c0_i32_1 = arith.constant 0 : i32
    return %c0_i32, %c0_i32_0 : i32, i32
  }
  func.func @transform_2(%arg0: i32) -> (i32, i32) {
    %c0_i32 = arith.constant 0 : i32
    %c0_i32_0 = arith.constant 0 : i32
    %c0_i32_1 = arith.constant 0 : i32
    return %c0_i32, %c0_i32_0 : i32, i32
  }
  func.func @transform_3(%arg0: i32) -> (i32, i32) {
    %c0_i32 = arith.constant 0 : i32
    %c0_i32_0 = arith.constant 0 : i32
    %c0_i32_1 = arith.constant 0 : i32
    return %c0_i32, %c0_i32_0 : i32, i32
  }
  func.func @transform_4(%arg0: i32) -> (i32, i32) {
    %c0_i32 = arith.constant 0 : i32
    %c0_i32_0 = arith.constant 0 : i32
    %c0_i32_1 = arith.constant 0 : i32
    return %c0_i32, %c0_i32_0 : i32, i32
  }
  func.func @transform_5(%arg0: i32) -> (i32, i32) {
    %c0_i32 = arith.constant 0 : i32
    %c0_i32_0 = arith.constant 0 : i32
    %c0_i32_1 = arith.constant 0 : i32
    return %c0_i32, %c0_i32_0 : i32, i32
  }
  func.func @transform_6(%arg0: i32) -> (i32, i32) {
    %c0_i32 = arith.constant 0 : i32
    %c0_i32_0 = arith.constant 0 : i32
    %c0_i32_1 = arith.constant 0 : i32
    return %c0_i32, %c0_i32_0 : i32, i32
  }
  func.func @transform_7(%arg0: i32) -> (i32, i32) {
    %c0_i32 = arith.constant 0 : i32
    %c0_i32_0 = arith.constant 0 : i32
    return %arg0, %c0_i32 : i32, i32
  }
  func.func @transform_8(%arg0: i32) -> (i32, i32) {
    %c0_i32 = arith.constant 0 : i32
    %c0_i32_0 = arith.constant 0 : i32
    return %arg0, %c0_i32 : i32, i32
  }
  func.func @transform_9(%arg0: i32) -> (i32, i32) {
    %c0_i32 = arith.constant 0 : i32
    %c0_i32_0 = arith.constant 0 : i32
    return %arg0, %c0_i32 : i32, i32
  }
}

</mosaic_0001>

<llo_original>
// kernel: actor_forward.1
$region0: #{actor_forward.1}
  #allocation0 [shape = 'u32[]', space=smem, size = 0x4, offset = 0x4, fixed_abs, tag = 'smem constant byte address 0x4 - core index']
  #allocation1 [shape = 'u32[72,128]{1,0:T(1,128)}', space=vmem, size = 0x9000, scoped, tag = 'internal scratch']
  %s0 = inlined_call_operand.vmem [shape: bf16[16,16], index: 0, kind: input, shape index: {}]
  %s1 = inlined_call_operand.vmem [shape: bf16[16,256], index: 1, kind: input, shape index: {}]
  %s2 = inlined_call_operand.vmem [shape: f32[1,256], index: 2, kind: input, shape index: {}]
  %s3 = inlined_call_operand.vmem [shape: bf16[256,256], index: 3, kind: input, shape index: {}]
  %s4 = inlined_call_operand.vmem [shape: f32[1,256], index: 4, kind: input, shape index: {}]
  %s5 = inlined_call_operand.vmem [shape: bf16[256,16], index: 5, kind: input, shape index: {}]
  %s6 = inlined_call_operand.vmem [shape: f32[1,16], index: 6, kind: input, shape index: {}]
  %s7 = inlined_call_operand.vmem [shape: f32[16,8], index: 7, kind: input, shape index: {}]
  %s8 = inlined_call_operand.vmem [shape: f32[16,8], index: 8, kind: output, shape index: {0}]
  %s9 = inlined_call_operand.vmem [shape: f32[16,1], index: 9, kind: output, shape index: {1}]
  %10 = xla_tuple %s8, %s9
  %s11 = sld [smem:[#allocation0]]
  $region50: #{actor_forward.1} parent=0
    _
  %s13 = ssub.s32 1, %s11
  %s14 = scalar_select 0, %s13, %s11
  // Predicated region
  $region2: #{actor_forward.1} parent=0 // pred_check
    _
  $region3: #{actor_forward.1} parent=0 // pred_check_branch
    %16 = sbr.rel (0) target = $region5
  $region4: #{actor_forward.1} parent=0 // pred_region
    _
  $region5: #{actor_forward.1} parent=0 // pred_fallthru
    _
  // Predicated region
  $region6: #{actor_forward.1} parent=0 // pred_check
    _
  $region7: #{actor_forward.1} parent=0 // pred_check_branch
    %18 = sbr.rel (0) target = $region9
  $region8: #{actor_forward.1} parent=0 // pred_region
    _
  $region9: #{actor_forward.1} parent=0 // pred_fallthru
    _
  // Predicated region
  $region10: #{actor_forward.1} parent=0 // pred_check
    _
  $region11: #{actor_forward.1} parent=0 // pred_check_branch
    %20 = sbr.rel (0) target = $region13
  $region12: #{actor_forward.1} parent=0 // pred_region
    _
  $region13: #{actor_forward.1} parent=0 // pred_fallthru
    _
  // Predicated region
  $region14: #{actor_forward.1} parent=0 // pred_check
    _
  $region15: #{actor_forward.1} parent=0 // pred_check_branch
    %22 = sbr.rel (0) target = $region17
  $region16: #{actor_forward.1} parent=0 // pred_region
    _
  $region17: #{actor_forward.1} parent=0 // pred_fallthru
    _
  // Predicated region
  $region18: #{actor_forward.1} parent=0 // pred_check
    _
  $region19: #{actor_forward.1} parent=0 // pred_check_branch
    %24 = sbr.rel (0) target = $region21
  $region20: #{actor_forward.1} parent=0 // pred_region
    _
  $region21: #{actor_forward.1} parent=0 // pred_fallthru
    _
  // Predicated region
  $region22: #{actor_forward.1} parent=0 // pred_check
    _
  $region23: #{actor_forward.1} parent=0 // pred_check_branch
    %26 = sbr.rel (0) target = $region25
  $region24: #{actor_forward.1} parent=0 // pred_region
    _
  $region25: #{actor_forward.1} parent=0 // pred_fallthru
    _
  // Predicated region
  $region26: #{actor_forward.1} parent=0 // pred_check
    _
  $region27: #{actor_forward.1} parent=0 // pred_check_branch
    %28 = sbr.rel (0) target = $region29
  $region28: #{actor_forward.1} parent=0 // pred_region
    _
  $region29: #{actor_forward.1} parent=0 // pred_fallthru
    _
  // Predicated region
  $region30: #{actor_forward.1} parent=0 // pred_check
    _
  $region31: #{actor_forward.1} parent=0 // pred_check_branch
    %30 = sbr.rel (0) target = $region33
  $region32: #{actor_forward.1} parent=0 // pred_region
    _
  $region33: #{actor_forward.1} parent=0 // pred_fallthru
    _
  %v32 = vld [vmem:[%s0] sm:$0xf]
  %v33 = vld [vmem:[%s0 + $0x4] sm:$0xf]
  %v34 = vld [vmem:[%s1] sm:$0xff]
  %v35 = vld [vmem:[%s1 + $0x8] sm:$0xff]
  %v36 = vld [vmem:[%s2] sm:$0x3]
  %v38 = vperm.slane %v36, 0
  %v39 = vperm.slane %v36, 1
  %v44 = vunpack.c.l.b16 %v32
  %v45 = vunpack.c.l.b16 %v33
  %v46 = vpack.c.b16 %v45, %v44
  %v49 = vunpack.c.l.b16 %v34
  %v50 = vunpack.c.h.b16 %v34
  %v51 = vunpack.c.l.b16 %v35
  %v52 = vunpack.c.h.b16 %v35
  %v53 = vpack.c.b16 %v51, %v49
  %v54 = vpack.c.b16 %v52, %v50
  %vm57 = vcmask 130048
  %v59 = vsel %vm57, %v46, 0
  %61 = vmatpush.bf16.msra.mxu0 0
  %62 = vmatpush.bf16.msra.mxu0 0
  %63 = vmatpush.bf16.msra.mxu0 0
  %64 = vmatpush.bf16.msra.mxu0 0
  %65 = vmatpush.bf16.msra.mxu0 0
  %66 = vmatpush.bf16.msra.mxu0 0
  %67 = vmatpush.bf16.msra.mxu0 0
  %68 = vmatpush.bf16.msra.mxu0 %v53
  %69 = vmatmul.bf16.gmra.mxu0 %v59
  %v70 = vpop.f32.mrf.mxu0
  %v71 = vadd.f32 %v38, %v70
  %v72 = vpop.f32.mrf.mxu0
  %v73 = vadd.f32 %v38, %v72
  %74 = vdwg.mxu0
  %75 = vmatpush.bf16.msra.mxu0 0
  %76 = vmatpush.bf16.msra.mxu0 0
  %77 = vmatpush.bf16.msra.mxu0 0
  %78 = vmatpush.bf16.msra.mxu0 0
  %79 = vmatpush.bf16.msra.mxu0 0
  %80 = vmatpush.bf16.msra.mxu0 0
  %81 = vmatpush.bf16.msra.mxu0 0
  %82 = vmatpush.bf16.msra.mxu0 %v54
  %83 = vmatmul.bf16.gmra.mxu0 %v59
  %v84 = vpop.f32.mrf.mxu0
  %v85 = vadd.f32 %v39, %v84
  %v86 = vpop.f32.mrf.mxu0
  %v87 = vadd.f32 %v39, %v86
  %88 = vdwg.mxu0
  %v89 = vmax.f32 %v71, 0.0
  %v90 = vmax.f32 %v85, 0.0
  %v91 = vmax.f32 %v73, 0.0
  %v92 = vmax.f32 %v87, 0.0
  %v93 = vpack.c.bf16 %v91, %v89
  %v94 = vpack.c.bf16 %v92, %v90
  %v95 = vld [vmem:[%s3] sm:$0xff]
  %v96 = vld [vmem:[%s3 + $0x8] sm:$0xff]
  %v97 = vld [vmem:[%s3 + $0x10] sm:$0xff]
  %v98 = vld [vmem:[%s3 + $0x18] sm:$0xff]
  %v99 = vld [vmem:[%s3 + $0x20] sm:$0xff]
  %v100 = vld [vmem:[%s3 + $0x28] sm:$0xff]
  %v101 = vld [vmem:[%s3 + $0x30] sm:$0xff]
  %v102 = vld [vmem:[%s3 + $0x38] sm:$0xff]
  %v103 = vld [vmem:[%s3 + $0x40] sm:$0xff]
  %v104 = vld [vmem:[%s3 + $0x48] sm:$0xff]
  %v105 = vld [vmem:[%s3 + $0x50] sm:$0xff]
  %v106 = vld [vmem:[%s3 + $0x58] sm:$0xff]
  %v107 = vld [vmem:[%s3 + $0x60] sm:$0xff]
  %v108 = vld [vmem:[%s3 + $0x68] sm:$0xff]
  %v109 = vld [vmem:[%s3 + $0x70] sm:$0xff]
  %v110 = vld [vmem:[%s3 + $0x78] sm:$0xff]
  %v111 = vld [vmem:[%s3 + $0x80] sm:$0xff]
  %v112 = vld [vmem:[%s3 + $0x88] sm:$0xff]
  %v113 = vld [vmem:[%s3 + $0x90] sm:$0xff]
  %v114 = vld [vmem:[%s3 + $0x98] sm:$0xff]
  %v115 = vld [vmem:[%s3 + $0xa0] sm:$0xff]
  %v116 = vld [vmem:[%s3 + $0xa8] sm:$0xff]
  %v117 = vld [vmem:[%s3 + $0xb0] sm:$0xff]
  %v118 = vld [vmem:[%s3 + $0xb8] sm:$0xff]
  %v119 = vld [vmem:[%s3 + $0xc0] sm:$0xff]
  %v120 = vld [vmem:[%s3 + $0xc8] sm:$0xff]
  %v121 = vld [vmem:[%s3 + $0xd0] sm:$0xff]
  %v122 = vld [vmem:[%s3 + $0xd8] sm:$0xff]
  %v123 = vld [vmem:[%s3 + $0xe0] sm:$0xff]
  %v124 = vld [vmem:[%s3 + $0xe8] sm:$0xff]
  %v125 = vld [vmem:[%s3 + $0xf0] sm:$0xff]
  %v126 = vld [vmem:[%s3 + $0xf8] sm:$0xff]
  %v127 = vld [vmem:[%s4] sm:$0x3]
  %v129 = vperm.slane %v127, 0
  %v130 = vperm.slane %v127, 1
  %v165 = vunpack.c.l.b16 %v95
  %v166 = vunpack.c.h.b16 %v95
  %v167 = vunpack.c.l.b16 %v96
  %v168 = vunpack.c.h.b16 %v96
  %v169 = vunpack.c.l.b16 %v97
  %v170 = vunpack.c.h.b16 %v97
  %v171 = vunpack.c.l.b16 %v98
  %v172 = vunpack.c.h.b16 %v98
  %v173 = vunpack.c.l.b16 %v99
  %v174 = vunpack.c.h.b16 %v99
  %v175 = vunpack.c.l.b16 %v100
  %v176 = vunpack.c.h.b16 %v100
  %v177 = vunpack.c.l.b16 %v101
  %v178 = vunpack.c.h.b16 %v101
  %v179 = vunpack.c.l.b16 %v102
  %v180 = vunpack.c.h.b16 %v102
  %v181 = vunpack.c.l.b16 %v103
  %v182 = vunpack.c.h.b16 %v103
  %v183 = vunpack.c.l.b16 %v104
  %v184 = vunpack.c.h.b16 %v104
  %v185 = vunpack.c.l.b16 %v105
  %v186 = vunpack.c.h.b16 %v105
  %v187 = vunpack.c.l.b16 %v106
  %v188 = vunpack.c.h.b16 %v106
  %v189 = vunpack.c.l.b16 %v107
  %v190 = vunpack.c.h.b16 %v107
  %v191 = vunpack.c.l.b16 %v108
  %v192 = vunpack.c.h.b16 %v108
  %v193 = vunpack.c.l.b16 %v109
  %v194 = vunpack.c.h.b16 %v109
  %v195 = vunpack.c.l.b16 %v110
  %v196 = vunpack.c.h.b16 %v110
  %v197 = vunpack.c.l.b16 %v111
  %v198 = vunpack.c.h.b16 %v111
  %v199 = vunpack.c.l.b16 %v112
  %v200 = vunpack.c.h.b16 %v112
  %v201 = vunpack.c.l.b16 %v113
  %v202 = vunpack.c.h.b16 %v113
  %v203 = vunpack.c.l.b16 %v114
  %v204 = vunpack.c.h.b16 %v114
  %v205 = vunpack.c.l.b16 %v115
  %v206 = vunpack.c.h.b16 %v115
  %v207 = vunpack.c.l.b16 %v116
  %v208 = vunpack.c.h.b16 %v116
  %v209 = vunpack.c.l.b16 %v117
  %v210 = vunpack.c.h.b16 %v117
  %v211 = vunpack.c.l.b16 %v118
  %v212 = vunpack.c.h.b16 %v118
  %v213 = vunpack.c.l.b16 %v119
  %v214 = vunpack.c.h.b16 %v119
  %v215 = vunpack.c.l.b16 %v120
  %v216 = vunpack.c.h.b16 %v120
  %v217 = vunpack.c.l.b16 %v121
  %v218 = vunpack.c.h.b16 %v121
  %v219 = vunpack.c.l.b16 %v122
  %v220 = vunpack.c.h.b16 %v122
  %v221 = vunpack.c.l.b16 %v123
  %v222 = vunpack.c.h.b16 %v123
  %v223 = vunpack.c.l.b16 %v124
  %v224 = vunpack.c.h.b16 %v124
  %v225 = vunpack.c.l.b16 %v125
  %v226 = vunpack.c.h.b16 %v125
  %v227 = vunpack.c.l.b16 %v126
  %v228 = vunpack.c.h.b16 %v126
  %v229 = vpack.c.b16 %v167, %v165
  %v230 = vpack.c.b16 %v168, %v166
  %v231 = vpack.c.b16 %v171, %v169
  %v232 = vpack.c.b16 %v172, %v170
  %v233 = vpack.c.b16 %v175, %v173
  %v234 = vpack.c.b16 %v176, %v174
  %v235 = vpack.c.b16 %v179, %v177
  %v236 = vpack.c.b16 %v180, %v178
  %v237 = vpack.c.b16 %v183, %v181
  %v238 = vpack.c.b16 %v184, %v182
  %v239 = vpack.c.b16 %v187, %v185
  %v240 = vpack.c.b16 %v188, %v186
  %v241 = vpack.c.b16 %v191, %v189
  %v242 = vpack.c.b16 %v192, %v190
  %v243 = vpack.c.b16 %v195, %v193
  %v244 = vpack.c.b16 %v196, %v194
  %v245 = vpack.c.b16 %v199, %v197
  %v246 = vpack.c.b16 %v200, %v198
  %v247 = vpack.c.b16 %v203, %v201
  %v248 = vpack.c.b16 %v204, %v202
  %v249 = vpack.c.b16 %v207, %v205
  %v250 = vpack.c.b16 %v208, %v206
  %v251 = vpack.c.b16 %v211, %v209
  %v252 = vpack.c.b16 %v212, %v210
  %v253 = vpack.c.b16 %v215, %v213
  %v254 = vpack.c.b16 %v216, %v214
  %v255 = vpack.c.b16 %v219, %v217
  %v256 = vpack.c.b16 %v220, %v218
  %v257 = vpack.c.b16 %v223, %v221
  %v258 = vpack.c.b16 %v224, %v222
  %v259 = vpack.c.b16 %v227, %v225
  %v260 = vpack.c.b16 %v228, %v226
  %293 = vmatpush.bf16.msra.mxu0 %v243
  %294 = vmatpush.bf16.msra.mxu0 %v241
  %295 = vmatpush.bf16.msra.mxu0 %v239
  %296 = vmatpush.bf16.msra.mxu0 %v237
  %297 = vmatpush.bf16.msra.mxu0 %v235
  %298 = vmatpush.bf16.msra.mxu0 %v233
  %299 = vmatpush.bf16.msra.mxu0 %v231
  %300 = vmatpush.bf16.msra.mxu0 %v229
  %301 = vmatmul.bf16.gmra.mxu0 %v93
  %v302 = vpop.f32.mrf.mxu0
  %v303 = vadd.f32 %v129, %v302
  %v304 = vpop.f32.mrf.mxu0
  %v305 = vadd.f32 %v129, %v304
  %306 = vdwg.mxu0
  %307 = vmatpush.bf16.msra.mxu0 %v259
  %308 = vmatpush.bf16.msra.mxu0 %v257
  %309 = vmatpush.bf16.msra.mxu0 %v255
  %310 = vmatpush.bf16.msra.mxu0 %v253
  %311 = vmatpush.bf16.msra.mxu0 %v251
  %312 = vmatpush.bf16.msra.mxu0 %v249
  %313 = vmatpush.bf16.msra.mxu0 %v247
  %314 = vmatpush.bf16.msra.mxu0 %v245
  %315 = vmatmul.bf16.gmra.mxu0 %v94
  %v316 = vpop.f32.mrf.mxu0
  %v317 = vadd.f32 %v303, %v316
  %v318 = vpop.f32.mrf.mxu0
  %v319 = vadd.f32 %v305, %v318
  %320 = vdwg.mxu0
  %321 = vmatpush.bf16.msra.mxu0 %v244
  %322 = vmatpush.bf16.msra.mxu0 %v242
  %323 = vmatpush.bf16.msra.mxu0 %v240
  %324 = vmatpush.bf16.msra.mxu0 %v238
  %325 = vmatpush.bf16.msra.mxu0 %v236
  %326 = vmatpush.bf16.msra.mxu0 %v234
  %327 = vmatpush.bf16.msra.mxu0 %v232
  %328 = vmatpush.bf16.msra.mxu0 %v230
  %329 = vmatmul.bf16.gmra.mxu0 %v93
  %v330 = vpop.f32.mrf.mxu0
  %v331 = vadd.f32 %v130, %v330
  %v332 = vpop.f32.mrf.mxu0
  %v333 = vadd.f32 %v130, %v332
  %334 = vdwg.mxu0
  %335 = vmatpush.bf16.msra.mxu0 %v260
  %336 = vmatpush.bf16.msra.mxu0 %v258
  %337 = vmatpush.bf16.msra.mxu0 %v256
  %338 = vmatpush.bf16.msra.mxu0 %v254
  %339 = vmatpush.bf16.msra.mxu0 %v252
  %340 = vmatpush.bf16.msra.mxu0 %v250
  %341 = vmatpush.bf16.msra.mxu0 %v248
  %342 = vmatpush.bf16.msra.mxu0 %v246
  %343 = vmatmul.bf16.gmra.mxu0 %v94
  %v344 = vpop.f32.mrf.mxu0
  %v345 = vadd.f32 %v331, %v344
  %v346 = vpop.f32.mrf.mxu0
  %v347 = vadd.f32 %v333, %v346
  %348 = vdwg.mxu0
  %v349 = vmax.f32 %v317, 0.0
  %v350 = vmax.f32 %v345, 0.0
  %v351 = vmax.f32 %v319, 0.0
  %v352 = vmax.f32 %v347, 0.0
  %v353 = vpack.c.bf16 %v351, %v349
  %v354 = vpack.c.bf16 %v352, %v350
  %v355 = vld [vmem:[%s5] sm:$0xf]
  %v356 = vld [vmem:[%s5 + $0x4] sm:$0xf]
  %v357 = vld [vmem:[%s5 + $0x8] sm:$0xf]
  %v358 = vld [vmem:[%s5 + $0xc] sm:$0xf]
  %v359 = vld [vmem:[%s5 + $0x10] sm:$0xf]
  %v360 = vld [vmem:[%s5 + $0x14] sm:$0xf]
  %v361 = vld [vmem:[%s5 + $0x18] sm:$0xf]
  %v362 = vld [vmem:[%s5 + $0x1c] sm:$0xf]
  %v363 = vld [vmem:[%s5 + $0x20] sm:$0xf]
  %v364 = vld [vmem:[%s5 + $0x24] sm:$0xf]
  %v365 = vld [vmem:[%s5 + $0x28] sm:$0xf]
  %v366 = vld [vmem:[%s5 + $0x2c] sm:$0xf]
  %v367 = vld [vmem:[%s5 + $0x30] sm:$0xf]
  %v368 = vld [vmem:[%s5 + $0x34] sm:$0xf]
  %v369 = vld [vmem:[%s5 + $0x38] sm:$0xf]
  %v370 = vld [vmem:[%s5 + $0x3c] sm:$0xf]
  %v371 = vld [vmem:[%s5 + $0x40] sm:$0xf]
  %v372 = vld [vmem:[%s5 + $0x44] sm:$0xf]
  %v373 = vld [vmem:[%s5 + $0x48] sm:$0xf]
  %v374 = vld [vmem:[%s5 + $0x4c] sm:$0xf]
  %v375 = vld [vmem:[%s5 + $0x50] sm:$0xf]
  %v376 = vld [vmem:[%s5 + $0x54] sm:$0xf]
  %v377 = vld [vmem:[%s5 + $0x58] sm:$0xf]
  %v378 = vld [vmem:[%s5 + $0x5c] sm:$0xf]
  %v379 = vld [vmem:[%s5 + $0x60] sm:$0xf]
  %v380 = vld [vmem:[%s5 + $0x64] sm:$0xf]
  %v381 = vld [vmem:[%s5 + $0x68] sm:$0xf]
  %v382 = vld [vmem:[%s5 + $0x6c] sm:$0xf]
  %v383 = vld [vmem:[%s5 + $0x70] sm:$0xf]
  %v384 = vld [vmem:[%s5 + $0x74] sm:$0xf]
  %v385 = vld [vmem:[%s5 + $0x78] sm:$0xf]
  %v386 = vld [vmem:[%s5 + $0x7c] sm:$0xf]
  %v387 = vld [vmem:[%s6] sm:$0x1]
  %v389 = vperm.slane %v387, 0
  %v423 = vunpack.c.l.b16 %v355
  %v424 = vunpack.c.l.b16 %v356
  %v425 = vunpack.c.l.b16 %v357
  %v426 = vunpack.c.l.b16 %v358
  %v427 = vunpack.c.l.b16 %v359
  %v428 = vunpack.c.l.b16 %v360
  %v429 = vunpack.c.l.b16 %v361
  %v430 = vunpack.c.l.b16 %v362
  %v431 = vunpack.c.l.b16 %v363
  %v432 = vunpack.c.l.b16 %v364
  %v433 = vunpack.c.l.b16 %v365
  %v434 = vunpack.c.l.b16 %v366
  %v435 = vunpack.c.l.b16 %v367
  %v436 = vunpack.c.l.b16 %v368
  %v437 = vunpack.c.l.b16 %v369
  %v438 = vunpack.c.l.b16 %v370
  %v439 = vunpack.c.l.b16 %v371
  %v440 = vunpack.c.l.b16 %v372
  %v441 = vunpack.c.l.b16 %v373
  %v442 = vunpack.c.l.b16 %v374
  %v443 = vunpack.c.l.b16 %v375
  %v444 = vunpack.c.l.b16 %v376
  %v445 = vunpack.c.l.b16 %v377
  %v446 = vunpack.c.l.b16 %v378
  %v447 = vunpack.c.l.b16 %v379
  %v448 = vunpack.c.l.b16 %v380
  %v449 = vunpack.c.l.b16 %v381
  %v450 = vunpack.c.l.b16 %v382
  %v451 = vunpack.c.l.b16 %v383
  %v452 = vunpack.c.l.b16 %v384
  %v453 = vunpack.c.l.b16 %v385
  %v454 = vunpack.c.l.b16 %v386
  %v455 = vpack.c.b16 %v424, %v423
  %v456 = vpack.c.b16 %v426, %v425
  %v457 = vpack.c.b16 %v428, %v427
  %v458 = vpack.c.b16 %v430, %v429
  %v459 = vpack.c.b16 %v432, %v431
  %v460 = vpack.c.b16 %v434, %v433
  %v461 = vpack.c.b16 %v436, %v435
  %v462 = vpack.c.b16 %v438, %v437
  %v463 = vpack.c.b16 %v440, %v439
  %v464 = vpack.c.b16 %v442, %v441
  %v465 = vpack.c.b16 %v444, %v443
  %v466 = vpack.c.b16 %v446, %v445
  %v467 = vpack.c.b16 %v448, %v447
  %v468 = vpack.c.b16 %v450, %v449
  %v469 = vpack.c.b16 %v452, %v451
  %v470 = vpack.c.b16 %v454, %v453
  %487 = vmatpush.bf16.msra.mxu0 %v462
  %488 = vmatpush.bf16.msra.mxu0 %v461
  %489 = vmatpush.bf16.msra.mxu0 %v460
  %490 = vmatpush.bf16.msra.mxu0 %v459
  %491 = vmatpush.bf16.msra.mxu0 %v458
  %492 = vmatpush.bf16.msra.mxu0 %v457
  %493 = vmatpush.bf16.msra.mxu0 %v456
  %494 = vmatpush.bf16.msra.mxu0 %v455
  %495 = vmatmul.bf16.gmra.mxu0 %v353
  %v496 = vpop.f32.mrf.mxu0
  %v497 = vadd.f32 %v389, %v496
  %v498 = vpop.f32.mrf.mxu0
  %v499 = vadd.f32 %v389, %v498
  %500 = vdwg.mxu0
  %501 = vmatpush.bf16.msra.mxu0 %v470
  %502 = vmatpush.bf16.msra.mxu0 %v469
  %503 = vmatpush.bf16.msra.mxu0 %v468
  %504 = vmatpush.bf16.msra.mxu0 %v467
  %505 = vmatpush.bf16.msra.mxu0 %v466
  %506 = vmatpush.bf16.msra.mxu0 %v465
  %507 = vmatpush.bf16.msra.mxu0 %v464
  %508 = vmatpush.bf16.msra.mxu0 %v463
  %509 = vmatmul.bf16.gmra.mxu0 %v354
  %v510 = vpop.f32.mrf.mxu0
  %v511 = vadd.f32 %v497, %v510
  %v512 = vpop.f32.mrf.mxu0
  %v513 = vadd.f32 %v499, %v512
  %514 = vdwg.mxu0
  %v515 = vmax.f32 %v511, -5.0
  %v516 = vmax.f32 %v513, -5.0
  %v517 = vmin.f32 %v515, 2.0
  %v518 = vmin.f32 %v516, 2.0
  %v519 = vmul.f32 %v517, 1.442695
  %v520 = vpow.pop %v519
  %v521 = vmul.f32 %v518, 1.442695
  %v522 = vpow.pop %v521
  %v523 = vld [vmem:[%s7] sm:$0xff]
  %v524 = vld [vmem:[%s7 + $0x8] sm:$0xff]
  %527 = vrot.lane.b32.xlu0 %v523, 8
  %v528 = vpop.permute.xlu0 %527
  %529 = vrot.lane.b32.xlu0 %v524, 8
  %v530 = vpop.permute.xlu0 %529
  %v533 = vmul.f32 %v520, %v528
  %v534 = vmul.f32 %v522, %v530
  %537 = vrot.lane.b32.xlu0 %v533, 120
  %v538 = vpop.permute.xlu0 %537
  %539 = vrot.lane.b32.xlu0 %v534, 120
  %v540 = vpop.permute.xlu0 %539
  %v543 = vadd.f32 %v511, %v538
  %v544 = vadd.f32 %v513, %v540
  %v545 = vtanh.pop %v543
  %v546 = vtanh.pop %v544
  %vm547 = vcmask 64512
  %548 = vst.msk [vmem:[%s8] sm:$0xff] %vm547, %v545
  %549 = vst.msk [vmem:[%s8 + $0x8] sm:$0xff] %vm547, %v546
  %v550 = vmul.f32 %v523, %v523
  %v551 = vmul.f32 %v524, %v524
  %v552 = vmul.f32 %v550, -0.5
  %v553 = vmul.f32 %v551, -0.5
  %556 = vrot.lane.b32.xlu0 %v517, 120
  %v557 = vpop.permute.xlu0 %556
  %558 = vrot.lane.b32.xlu0 %v518, 120
  %v559 = vpop.permute.xlu0 %558
  %v562 = vsub.f32 %v552, %v557
  %v563 = vsub.f32 %v553, %v559
  %v564 = vsub.f32 %v562, 0.9189385
  %v565 = vsub.f32 %v563, 0.9189385
  %v566 = vsel %vm547, %v564, 0.0
  %567 = vadd.xlane.f32.xlu0 %v566
  %v568 = vpop.xlane.xlu0 %567
  %v569 = vsel %vm547, %v565, 0.0
  %570 = vadd.xlane.f32.xlu0 %v569
  %v571 = vpop.xlane.xlu0 %570
  %v572 = vmul.f32 %v543, -2.0
  %v573 = vmul.f32 %v544, -2.0
  %v574 = vmax.f32 %v572, 0.0
  %v575 = vmax.f32 %v573, 0.0
  %v576 = vand.u32 2147483647, %v572
  %v577 = vand.u32 2147483647, %v573
  %v578 = vsub.f32 0.0, %v576
  %v579 = vsub.f32 0.0, %v577
  %v580 = vmul.f32 %v578, 1.442695
  %v581 = vpow.pop %v580
  %v582 = vmul.f32 %v579, 1.442695
  %v583 = vpow.pop %v582
  %v584 = vadd.f32 %v581, 1.0
  %v585 = vlog2.pop %v584
  %v586 = vmul.f32 %v585, 0.6931472
  %v587 = vmul.f32 -0.5, %v581
  %v588 = vadd.f32 %v587, 1.0
  %v589 = vmul.f32 %v588, %v581
  %v590 = vand.u32 2147483647, %v581
  %vm591 = vcmp.lt.f32.partialorder %v590, 0.0004427343
  %v592 = vsel %vm591, %v589, %v586
  %v593 = vadd.f32 %v583, 1.0
  %v594 = vlog2.pop %v593
  %v595 = vmul.f32 %v594, 0.6931472
  %v596 = vmul.f32 -0.5, %v583
  %v597 = vadd.f32 %v596, 1.0
  %v598 = vmul.f32 %v597, %v583
  %v599 = vand.u32 2147483647, %v583
  %vm600 = vcmp.lt.f32.partialorder %v599, 0.0004427343
  %v601 = vsel %vm600, %v598, %v595
  %v602 = vadd.f32 %v574, %v592
  %v603 = vadd.f32 %v575, %v601
  %v604 = vsub.f32 0.6931472, %v543
  %v605 = vsub.f32 0.6931472, %v544
  %v606 = vsub.f32 %v604, %v602
  %v607 = vsub.f32 %v605, %v603
  %v608 = vmul.f32 %v606, 2.0
  %v609 = vmul.f32 %v607, 2.0
  %v610 = vsel %vm547, %v608, 0.0
  %611 = vadd.xlane.f32.xlu0 %v610
  %v612 = vpop.xlane.xlu0 %611
  %v613 = vsel %vm547, %v609, 0.0
  %614 = vadd.xlane.f32.xlu0 %v613
  %v615 = vpop.xlane.xlu0 %614
  %v616 = vsub.f32 %v568, %v612
  %v617 = vsub.f32 %v571, %v615
  %vm618 = vcmask 7168
  %619 = vst.msk [vmem:[%s9] sm:$0xff] %vm618, %v616
  %620 = vst.msk [vmem:[%s9 + $0x8] sm:$0xff] %vm618, %v617
  // Predicated region
  $region34: #{actor_forward.1} parent=0 // pred_check
    _
  $region35: #{actor_forward.1} parent=0 // pred_check_branch
    %622 = sbr.rel (0) target = $region37
  $region36: #{actor_forward.1} parent=0 // pred_region
    _
  $region37: #{actor_forward.1} parent=0 // pred_fallthru
    _
  // Predicated region
  $region38: #{actor_forward.1} parent=0 // pred_check
    _
  $region39: #{actor_forward.1} parent=0 // pred_check_branch
    %624 = sbr.rel (0) target = $region41
  $region40: #{actor_forward.1} parent=0 // pred_region
    _
  $region41: #{actor_forward.1} parent=0 // pred_fallthru
    _
  // Predicated region
  $region42: #{actor_forward.1} parent=0 // pred_check
    _
  $region43: #{actor_forward.1} parent=0 // pred_check_branch
    %626 = sbr.rel (0) target = $region45
  $region44: #{actor_forward.1} parent=0 // pred_region
    _
  $region45: #{actor_forward.1} parent=0 // pred_fallthru
    _
  // Predicated region
  $region46: #{actor_forward.1} parent=0 // pred_check
    _
  $region47: #{actor_forward.1} parent=0 // pred_check_branch
    %628 = sbr.rel (0) target = $region49
  $region48: #{actor_forward.1} parent=0 // pred_region
    _
  $region49: #{actor_forward.1} parent=0 // pred_fallthru
    _

</llo_original>
